<compile_context>
chip_gen: v6e
topology: v6e:2x2x1
jax: 0.10.0
libtpu: 0.0.40
codegen_flags: <defaults>
</compile_context>

<pallas_src>
import functools
import math

import jax
import jax.numpy as jnp
from jax import lax
from jax.experimental import pallas as pl
from jax.experimental.pallas import tpu as pltpu


# ----------------------------------------------------------------------------
# tiling helper
# ----------------------------------------------------------------------------
def _row_tile(n_rows, row_bytes, budget_bytes=4 << 20):
    """Rows per grid step: full extent if everything fits the per-tile budget,
    otherwise the largest multiple of 8 that does (keeps the double-buffered tiles
    well inside v7x's 32 MiB scoped VMEM; generous on v5e/v6e's 128 MiB)."""
    if n_rows * row_bytes <= budget_bytes:
        return n_rows
    return max(8, int(budget_bytes // row_bytes) // 8 * 8)


# ----------------------------------------------------------------------------
# ActNorm2D  (channels on axis 1, "height"/feature on axis 2, like the nn.Module)
# ----------------------------------------------------------------------------
def _actnorm_init_kernel(x_ref, loc_ref, scale_ref, sum_ref, sq_ref, *, n_rows):
    """Per-channel mean / unbiased std over (batch, feature), tiled over batch."""
    i = pl.program_id(0)
    last = pl.num_programs(0) - 1

    @pl.when(i == 0)
    def _():
        sum_ref[...] = jnp.zeros_like(sum_ref)
        sq_ref[...] = jnp.zeros_like(sq_ref)

    x = x_ref[...].astype(jnp.float32)                         # (tn, C, L)
    tn = x.shape[0]
    if n_rows % tn != 0:                                       # static: only if a partial tail block exists
        row = i * tn + lax.broadcasted_iota(jnp.int32, x.shape, 0)
        x = jnp.where(row < n_rows, x, 0.0)
    sum_ref[...] += jnp.sum(x, axis=(0, 2))[None, :]           # (1, C)
    sq_ref[...] += jnp.sum(x * x, axis=(0, 2))[None, :]        # (1, C)

    @pl.when(i == last)
    def _():
        cnt = n_rows * x_ref.shape[2]
        mean = sum_ref[...] / cnt
        # torch .std() default is unbiased (ddof=1).  f32 accumulators; clamp the tiny
        # negative rounding error of the sumsq formula before the sqrt.
        var = (sq_ref[...] - cnt * mean * mean) / (cnt - 1)
        std = jnp.sqrt(jnp.maximum(var, 0.0))
        loc_ref[...] = -mean                                   # use_shift=False
        scale_ref[...] = 1.0 / (std + 1e-6)


def actnorm_init(x):
    """(loc, scale), each (1, C, 1), computed from x like ActNorm2D.initialize."""
    n, c, l = x.shape
    tn = _row_tile(n, c * l * x.dtype.itemsize)
    loc2d, scale2d = pl.pallas_call(
        functools.partial(_actnorm_init_kernel, n_rows=n),
        out_shape=(jax.ShapeDtypeStruct((1, c), jnp.float32),
                   jax.ShapeDtypeStruct((1, c), jnp.float32)),
        grid=(pl.cdiv(n, tn),),
        in_specs=[pl.BlockSpec((tn, c, l), lambda i: (i, 0, 0))],
        out_specs=(pl.BlockSpec((1, c), lambda i: (0, 0)),
                   pl.BlockSpec((1, c), lambda i: (0, 0))),
        scratch_shapes=[pltpu.VMEM((1, c), jnp.float32),
                        pltpu.VMEM((1, c), jnp.float32)],
        compiler_params=pltpu.CompilerParams(dimension_semantics=("arbitrary",)),
    )(x)
    return loc2d.reshape(1, c, 1), scale2d.reshape(1, c, 1)


def _actnorm_apply_kernel(x_ref, loc_ref, scale_ref, out_ref):
    # x: (tn, C*L); loc/scale: (1, C*L) pre-broadcast slabs (sublane broadcast only).
    x = x_ref[...].astype(jnp.float32)
    out_ref[...] = (scale_ref[...] * (x + loc_ref[...])).astype(out_ref.dtype)


def actnorm_apply(x, loc, scale):
    """out = scale * (x + loc);  logdet = L * sum(log|scale|)."""
    n, c, l = x.shape
    d = c * l
    itemsize = x.dtype.itemsize
    x2d = x.reshape(n, d)                                       # free reshape; lane dim = C*L
    loc_slab = jnp.broadcast_to(loc.astype(jnp.float32).reshape(1, c, 1),
                                (1, c, l)).reshape(1, d)
    scale_slab = jnp.broadcast_to(scale.astype(jnp.float32).reshape(1, c, 1),
                                  (1, c, l)).reshape(1, d)
    tn = _row_tile(n, 2 * d * itemsize)                         # x + out streamed per row
    # NOTE: input_output_aliases={0: 0} would save an HBM buffer, but callers (and the
    # test below) still read x after this call, so we do not alias.
    out2d = pl.pallas_call(
        _actnorm_apply_kernel,
        out_shape=jax.ShapeDtypeStruct((n, d), x.dtype),
        grid=(pl.cdiv(n, tn),),
        in_specs=[pl.BlockSpec((tn, d), lambda i: (i, 0)),
                  pl.BlockSpec((1, d), lambda i: (0, 0)),
                  pl.BlockSpec((1, d), lambda i: (0, 0))],
        out_specs=pl.BlockSpec((tn, d), lambda i: (i, 0)),
        compiler_params=pltpu.CompilerParams(dimension_semantics=("parallel",)),
        cost_estimate=pl.CostEstimate(flops=2 * n * d, transcendentals=0,
                                      bytes_accessed=2 * n * d * itemsize + 8 * d),
    )(x2d, loc_slab, scale_slab)
    # logdet is O(C) work — hoisted out of the per-tile hot loop.
    logdet = jnp.float32(l) * jnp.sum(jnp.log(jnp.abs(scale.astype(jnp.float32))))
    return out2d.reshape(n, c, l), logdet


# ----------------------------------------------------------------------------
# GraphAffineCoupling — elementwise combine in Pallas, (s, t) tower in plain jnp
# ----------------------------------------------------------------------------
def _coupling_combine_kernel(x_ref, s_ref, t_ref, mask_ref, out_ref):
    x = x_ref[...].astype(jnp.float32)
    s = s_ref[...].astype(jnp.float32)
    t = t_ref[...].astype(jnp.float32)
    m = mask_ref[...]
    out_ref[...] = (m * x + (1.0 - m) * (x + t) * s).astype(out_ref.dtype)


def coupling_combine(x, s, t, mask):
    """out = mask*x + (1-mask)*(x+t)*s   (== masked_x + (1-mask)*(x+t)*s)."""
    n, node, dim = x.shape
    d = node * dim
    itemsize = x.dtype.itemsize
    x2, s2, t2 = x.reshape(n, d), s.reshape(n, d), t.reshape(n, d)
    m2 = mask.astype(jnp.float32).reshape(1, d)
    tn = _row_tile(n, 4 * d * itemsize)                         # x, s, t, out streamed per row
    out2 = pl.pallas_call(
        _coupling_combine_kernel,
        out_shape=jax.ShapeDtypeStruct((n, d), x.dtype),
        grid=(pl.cdiv(n, tn),),
        in_specs=[pl.BlockSpec((tn, d), lambda i: (i, 0)),
                  pl.BlockSpec((tn, d), lambda i: (i, 0)),
                  pl.BlockSpec((tn, d), lambda i: (i, 0)),
                  pl.BlockSpec((1, d), lambda i: (0, 0))],
        out_specs=pl.BlockSpec((tn, d), lambda i: (i, 0)),
        compiler_params=pltpu.CompilerParams(dimension_semantics=("parallel",)),
        cost_estimate=pl.CostEstimate(flops=5 * n * d, transcendentals=0,
                                      bytes_accessed=4 * n * d * itemsize + 4 * d),
    )(x2, s2, t2, m2)
    return out2.reshape(n, node, dim)


def _init_linear(key, in_size, out_size):
    k1, k2 = jax.random.split(key)
    bound = 1.0 / math.sqrt(in_size)                            # nn.Linear-style default init
    return {"w": jax.random.uniform(k1, (out_size, in_size), jnp.float32, -bound, bound),
            "b": jax.random.uniform(k2, (out_size,), jnp.float32, -bound, bound)}


def graph_linear(p, x):
    """GraphLinear: affine transform over the last axis."""
    return jnp.matmul(x, p["w"].T) + p["b"]


def graph_conv(p, adj, h, num_edge_type):
    """GraphConv: self transform + per-edge-type transform contracted with adj."""
    mb, node, _ = h.shape
    out_ch = p["self"]["w"].shape[0]
    hs = graph_linear(p["self"], h)                             # (mb, node, out_ch)
    m = graph_linear(p["edge"], h)                              # (mb, node, out_ch * E)
    m = m.reshape(mb, node, out_ch, num_edge_type)
    m = jnp.transpose(m, (0, 3, 1, 2))                          # (mb, E, node, out_ch)
    hr = jnp.matmul(adj, m).sum(axis=1)                         # (mb, node, out_ch)
    return hs + hr


def batch_norm1d(h, eps=1e-5):
    """nn.BatchNorm1d(n_node), training-mode forward: per-node batch stats,
    default weight=1 / bias=0.
    TODO(synk): running-stat buffer updates are not modeled (no effect on the output)."""
    mean = jnp.mean(h, axis=(0, 2), keepdims=True)
    var = jnp.mean(jnp.square(h - mean), axis=(0, 2), keepdims=True)
    return (h - mean) / jnp.sqrt(var + eps)


def _s_t_function(params, adj, x, num_edge_type, affine):
    h = x
    for p in params["gnn"]:
        h = graph_conv(p, adj, h, num_edge_type)
        h = batch_norm1d(h)
        h = jax.nn.relu(h)
    for p in params["lin"][:-1]:
        h = graph_linear(p, h)
        h = batch_norm1d(h)
        h = jax.nn.relu(h)
    h = graph_linear(params["lin"][-1], h)
    if affine:
        log_s, t = jnp.split(h, 2, axis=-1)
        return jax.nn.sigmoid(log_s), t
    return None, h


# ----------------------------------------------------------------------------
# FlowOnGraph
# ----------------------------------------------------------------------------
class FlowOnGraph:
    """JAX/Pallas port of the PyTorch FlowOnGraph module (forward path)."""

    def __init__(self, key, n_node, in_dim, hidden_dim_dict, masked_row,
                 affine=True, num_edge_type=4):
        self.n_node = n_node
        self.in_dim = in_dim
        self.affine = affine
        self.num_edge_type = num_edge_type

        # --- ActNorm2D(in_dim=n_node): per-node loc/scale, data-dependent init ---
        self.act_loc = jnp.zeros((1, n_node, 1), jnp.float32)
        self.act_scale = jnp.ones((1, n_node, 1), jnp.float32)
        self.act_initialized = False
        self.act_use_shift = False

        # --- GraphAffineCoupling parameters ---
        n_keys = 2 * len(hidden_dim_dict["gnn"]) + len(hidden_dim_dict["linear"]) + 1
        keys = iter(jax.random.split(key, n_keys))
        gnn, last = [], in_dim
        for out_dim in hidden_dim_dict["gnn"]:
            gnn.append({"self": _init_linear(next(keys), last, out_dim),
                        "edge": _init_linear(next(keys), last, out_dim * num_edge_type)})
            last = out_dim
        lin = []
        for out_dim in hidden_dim_dict["linear"]:
            lin.append(_init_linear(next(keys), last, out_dim))
            last = out_dim
        lin.append(_init_linear(next(keys), last, in_dim * 2 if affine else in_dim))
        self.params = {"gnn": gnn, "lin": lin}

        mask = jnp.ones((n_node, in_dim), jnp.float32)
        self.mask = mask.at[jnp.asarray(masked_row)].set(0.0)

    def _actnorm_forward(self, x):
        if not self.act_initialized:
            loc, scale = actnorm_init(x)
            if not self.act_use_shift:
                self.act_loc = loc
            self.act_scale = scale
            self.act_initialized = True
        return actnorm_apply(x, self.act_loc, self.act_scale)

    def _coupling_forward(self, adj, x):
        masked_x = self.mask[None] * x
        s, t = _s_t_function(self.params, adj, masked_x, self.num_edge_type, self.affine)
        if self.affine:
            out = coupling_combine(x, s, t, self.mask)
            logdet = jnp.sum(jnp.log(jnp.abs(s)).reshape(x.shape[0], -1), axis=1)
        else:
            out = masked_x + t * (1.0 - self.mask[None])
            logdet = None
        return out, logdet

    def forward(self, adj, x):
        out, logdet = self._actnorm_forward(x)
        det1 = 0.0
        out, det2 = self._coupling_forward(adj, out)
        logdet = logdet + det1
        if det2 is not None:
            logdet = logdet + det2
        return out, logdet

    def reverse(self, adj, y):
        # TODO(synk): reverse path is plain jnp (not on the hot path).
        masked_y = self.mask[None] * y
        s, t = _s_t_function(self.params, adj, masked_y, self.num_edge_type, self.affine)
        if self.affine:
            x = masked_y + (1.0 - self.mask[None]) * (y / s - t)
        else:
            x = masked_y + (1.0 - self.mask[None]) * (y - t)
        return x / self.act_scale - self.act_loc


if __name__ == "__main__":
    key = jax.random.PRNGKey(0)
    mb, n_node, in_dim, n_edge = 2, 9, 8, 4
    hidden_dim_dict = {"gnn": [16], "linear": [16]}
    masked_row = [0, 2, 4, 6, 8]

    k_x, k_adj, k_p = jax.random.split(key, 3)
    x = jax.random.normal(k_x, (mb, n_node, in_dim), dtype=jnp.float32)
    adj = jax.random.uniform(k_adj, (mb, n_edge, n_node, n_node), dtype=jnp.float32)

    model = FlowOnGraph(k_p, n_node, in_dim, hidden_dim_dict, masked_row,
                        affine=True, num_edge_type=n_edge)
    out, logdet = model.forward(adj, x)
    out = jax.block_until_ready(out)
    logdet = jax.block_until_ready(logdet)

    # ---- pure-JAX reference of the same math ----
    flat = jnp.transpose(x, (1, 0, 2)).reshape(n_node, -1)
    mean = flat.mean(axis=1)
    std = flat.std(axis=1, ddof=1)
    loc_ref = -mean[None, :, None]
    scale_ref = (1.0 / (std + 1e-6))[None, :, None]
    y_ref = scale_ref * (x + loc_ref)
    ld1_ref = in_dim * jnp.sum(jnp.log(jnp.abs(scale_ref)))
    masked_y = model.mask[None] * y_ref
    s_ref, t_ref = _s_t_function(model.params, adj, masked_y, n_edge, True)
    out_ref = masked_y + (1.0 - model.mask[None]) * (y_ref + t_ref) * s_ref
    ld2_ref = jnp.sum(jnp.log(jnp.abs(s_ref)).reshape(mb, -1), axis=1)
    logdet_ref = ld1_ref + ld2_ref

    assert out.shape == (mb, n_node, in_dim)
    assert jnp.allclose(out, out_ref, atol=1e-3, rtol=1e-3)
    assert jnp.allclose(logdet, logdet_ref, atol=1e-3, rtol=1e-3)

    print("KERNEL_OK")
</pallas_src>

<mosaic_0001>
module attributes {stable_mosaic.version = 11 : i64} {
  func.func @_actnorm_init_kernel(%arg0: i32, %arg1: memref<2x9x8xf32, #tpu.memory_space<vmem>>, %arg2: memref<1x9xf32, #tpu.memory_space<vmem>>, %arg3: memref<1x9xf32, #tpu.memory_space<vmem>>, %arg4: memref<1x9xf32, #tpu.memory_space<vmem>>, %arg5: memref<1x9xf32, #tpu.memory_space<vmem>>) attributes {dimension_semantics = [#tpu.dimension_semantics<arbitrary>], iteration_bounds = array<i64: 1>, scalar_prefetch = 0 : i64, scratch_operands = 2 : i64, tpu.core_type = #tpu.core_type<tc>, window_params = [{transform_indices = @transform_0, window_bounds = array<i64: 2, 9, 8>}, {pipeline_mode = #tpu.pipeline_mode<synchronous>, transform_indices = @transform_1, window_bounds = array<i64: 1, 9>}, {pipeline_mode = #tpu.pipeline_mode<synchronous>, transform_indices = @transform_2, window_bounds = array<i64: 1, 9>}]} {
    %c0_i32 = arith.constant 0 : i32
    %0 = arith.cmpi eq, %arg0, %c0_i32 : i32
    %1 = arith.extui %0 : i1 to i32
    %c0_i32_0 = arith.constant 0 : i32
    %2 = arith.cmpi ne, %1, %c0_i32_0 : i32
    scf.if %2 {
      %cst_14 = arith.constant 0.000000e+00 : f32
      %18 = vector.broadcast %cst_14 : f32 to vector<1x9xf32>
      %c0_15 = arith.constant 0 : index
      %c0_16 = arith.constant 0 : index
      %19 = vector.load %arg4[%c0_15, %c0_16] : memref<1x9xf32, #tpu.memory_space<vmem>>, vector<1x9xf32>
      tpu.vector_store %arg4[%c0_15, %c0_16], %18 {strides = array<i32>} : memref<1x9xf32, #tpu.memory_space<vmem>>, vector<1x9xf32>,
      %cst_17 = arith.constant 0.000000e+00 : f32
      %20 = vector.broadcast %cst_17 : f32 to vector<1x9xf32>
      %c0_18 = arith.constant 0 : index
      %c0_19 = arith.constant 0 : index
      %21 = vector.load %arg5[%c0_18, %c0_19] : memref<1x9xf32, #tpu.memory_space<vmem>>, vector<1x9xf32>
      tpu.vector_store %arg5[%c0_18, %c0_19], %20 {strides = array<i32>} : memref<1x9xf32, #tpu.memory_space<vmem>>, vector<1x9xf32>,
    } else {
    }
    %c0 = arith.constant 0 : index
    %c0_1 = arith.constant 0 : index
    %c0_2 = arith.constant 0 : index
    %3 = vector.load %arg1[%c0, %c0_1, %c0_2] : memref<2x9x8xf32, #tpu.memory_space<vmem>>, vector<2x9x8xf32>
    %c0_3 = arith.constant 0 : index
    %c0_4 = arith.constant 0 : index
    %4 = vector.load %arg4[%c0_3, %c0_4] : memref<1x9xf32, #tpu.memory_space<vmem>>, vector<1x9xf32>
    %cst = arith.constant dense<0.000000e+00> : vector<9xf32>
    %5 = vector.multi_reduction <add>, %3, %cst [0, 2] : vector<2x9x8xf32> to vector<9xf32>
    %6 = vector.shape_cast %5 : vector<9xf32> to vector<1x9xf32>
    %7 = arith.addf %4, %6 : vector<1x9xf32>
    %c0_5 = arith.constant 0 : index
    %c0_6 = arith.constant 0 : index
    %8 = vector.load %arg4[%c0_5, %c0_6] : memref<1x9xf32, #tpu.memory_space<vmem>>, vector<1x9xf32>
    tpu.vector_store %arg4[%c0_5, %c0_6], %7 {strides = array<i32>} : memref<1x9xf32, #tpu.memory_space<vmem>>, vector<1x9xf32>,
    %c0_7 = arith.constant 0 : index
    %c0_8 = arith.constant 0 : index
    %9 = vector.load %arg5[%c0_7, %c0_8] : memref<1x9xf32, #tpu.memory_space<vmem>>, vector<1x9xf32>
    %10 = arith.mulf %3, %3 : vector<2x9x8xf32>
    %cst_9 = arith.constant dense<0.000000e+00> : vector<9xf32>
    %11 = vector.multi_reduction <add>, %10, %cst_9 [0, 2] : vector<2x9x8xf32> to vector<9xf32>
    %12 = vector.shape_cast %11 : vector<9xf32> to vector<1x9xf32>
    %13 = arith.addf %9, %12 : vector<1x9xf32>
    %c0_10 = arith.constant 0 : index
    %c0_11 = arith.constant 0 : index
    %14 = vector.load %arg5[%c0_10, %c0_11] : memref<1x9xf32, #tpu.memory_space<vmem>>, vector<1x9xf32>
    tpu.vector_store %arg5[%c0_10, %c0_11], %13 {strides = array<i32>} : memref<1x9xf32, #tpu.memory_space<vmem>>, vector<1x9xf32>,
    %c0_i32_12 = arith.constant 0 : i32
    %15 = arith.cmpi eq, %arg0, %c0_i32_12 : i32
    %16 = arith.extui %15 : i1 to i32
    %c0_i32_13 = arith.constant 0 : i32
    %17 = arith.cmpi ne, %16, %c0_i32_13 : i32
    scf.if %17 {
      %c0_14 = arith.constant 0 : index
      %c0_15 = arith.constant 0 : index
      %18 = vector.load %arg4[%c0_14, %c0_15] : memref<1x9xf32, #tpu.memory_space<vmem>>, vector<1x9xf32>
      %cst_16 = arith.constant 1.600000e+01 : f32
      %19 = vector.broadcast %cst_16 : f32 to vector<1x9xf32>
      %20 = arith.divf %18, %19 : vector<1x9xf32>
      %c0_17 = arith.constant 0 : index
      %c0_18 = arith.constant 0 : index
      %21 = vector.load %arg5[%c0_17, %c0_18] : memref<1x9xf32, #tpu.memory_space<vmem>>, vector<1x9xf32>
      %cst_19 = arith.constant 1.600000e+01 : f32
      %22 = vector.broadcast %cst_19 : f32 to vector<1x9xf32>
      %23 = arith.mulf %22, %20 : vector<1x9xf32>
      %24 = arith.mulf %23, %20 : vector<1x9xf32>
      %25 = arith.subf %21, %24 : vector<1x9xf32>
      %cst_20 = arith.constant 1.500000e+01 : f32
      %26 = vector.broadcast %cst_20 : f32 to vector<1x9xf32>
      %27 = arith.divf %25, %26 : vector<1x9xf32>
      %cst_21 = arith.constant 0.000000e+00 : f32
      %28 = vector.broadcast %cst_21 : f32 to vector<1x9xf32>
      %29 = arith.maximumf %27, %28 : vector<1x9xf32>
      %30 = math.sqrt %29 : vector<1x9xf32>
      %cst_22 = arith.constant 0.000000e+00 : f32
      %31 = vector.broadcast %cst_22 : f32 to vector<1x9xf32>
      %32 = arith.subf %31, %20 : vector<1x9xf32>
      %c0_23 = arith.constant 0 : index
      %c0_24 = arith.constant 0 : index
      %33 = vector.load %arg2[%c0_23, %c0_24] : memref<1x9xf32, #tpu.memory_space<vmem>>, vector<1x9xf32>
      tpu.vector_store %arg2[%c0_23, %c0_24], %32 {strides = array<i32>} : memref<1x9xf32, #tpu.memory_space<vmem>>, vector<1x9xf32>,
      %cst_25 = arith.constant 9.99999997E-7 : f32
      %34 = vector.broadcast %cst_25 : f32 to vector<1x9xf32>
      %35 = arith.addf %30, %34 : vector<1x9xf32>
      %cst_26 = arith.constant 1.000000e+00 : f32
      %36 = vector.broadcast %cst_26 : f32 to vector<1x9xf32>
      %37 = arith.divf %36, %35 : vector<1x9xf32>
      %c0_27 = arith.constant 0 : index
      %c0_28 = arith.constant 0 : index
      %38 = vector.load %arg3[%c0_27, %c0_28] : memref<1x9xf32, #tpu.memory_space<vmem>>, vector<1x9xf32>
      tpu.vector_store %arg3[%c0_27, %c0_28], %37 {strides = array<i32>} : memref<1x9xf32, #tpu.memory_space<vmem>>, vector<1x9xf32>,
    } else {
    }
    return
  }
  func.func @transform_0(%arg0: i32) -> (i32, i32, i32) {
    %c0_i32 = arith.constant 0 : i32
    %c0_i32_0 = arith.constant 0 : i32
    %c0_i32_1 = arith.constant 0 : i32
    return %arg0, %c0_i32, %c0_i32_0 : i32, i32, i32
  }
  func.func @transform_1(%arg0: i32) -> (i32, i32) {
    %c0_i32 = arith.constant 0 : i32
    %c0_i32_0 = arith.constant 0 : i32
    %c0_i32_1 = arith.constant 0 : i32
    return %c0_i32, %c0_i32_0 : i32, i32
  }
  func.func @transform_2(%arg0: i32) -> (i32, i32) {
    %c0_i32 = arith.constant 0 : i32
    %c0_i32_0 = arith.constant 0 : i32
    %c0_i32_1 = arith.constant 0 : i32
    return %c0_i32, %c0_i32_0 : i32, i32
  }
}

</mosaic_0001>

<llo_original>
// kernel: tpu_custom_call.1
$region0: #{tpu_custom_call.1}
  #allocation0 [shape = 'u32[]', space=smem, size = 0x4, offset = 0x4, fixed_abs, tag = 'smem constant byte address 0x4 - core index']
  #allocation1 [shape = 'u32[144,128]{1,0:T(1,128)}', space=vmem, size = 0x12000, scoped, tag = 'internal scratch']
  #allocation2 [shape = 'f32[1,9]{1,0:T(1,128)}', space=vmem, size = 0x200, scoped, tag = 'scratch operand']
  #allocation3 [shape = 'f32[1,9]{1,0:T(1,128)}', space=vmem, size = 0x200, scoped, tag = 'scratch operand']
  %s0 = inlined_call_operand.vmem [shape: f32[2,9,8], index: 0, kind: input, shape index: {}]
  %s1 = inlined_call_operand.hbm [shape: f32[1,9], index: 1, kind: output, shape index: {0}]
  %s2 = inlined_call_operand.hbm [shape: f32[1,9], index: 2, kind: output, shape index: {1}]
  %3 = xla_tuple %s1, %s2
  %s4 = sld [smem:[#allocation0]]
  $region30: #{tpu_custom_call.1} parent=0
    _
  %s6 = ssub.s32 1, %s4
  %s7 = scalar_select 0, %s6, %s4
  $region1: #{tpu_custom_call.1} parent=0
    #allocation4 [shape = 'u8[512]{0}', space=vmem, size = 0x400, scoped, tag = 'output window, operand 0, single buffered']
    #allocation5 [shape = 's32[1]{0}', space=sflag, size = 0x4, scoped, tag = 'scoped memory for tpu_custom_call.1']
    #allocation6 [shape = 'u8[512]{0}', space=vmem, size = 0x400, scoped, tag = 'output window, operand 1, single buffered']
    #allocation7 [shape = 's32[1]{0}', space=sflag, size = 0x4, scoped, tag = 'scoped memory for tpu_custom_call.1']
    %8 = vsyncpa [#allocation5], 0
    %9 = vsyncpa [#allocation7], 0
    // Predicated region
    $region2: #{tpu_custom_call.1} parent=1 // pred_check
      _
    $region3: #{tpu_custom_call.1} parent=1 // pred_check_branch
      %11 = sbr.rel (0) target = $region5
    $region4: #{tpu_custom_call.1} parent=1 // pred_region
      _
    $region5: #{tpu_custom_call.1} parent=1 // pred_fallthru
      _
    %p12 = scmp.eq.s32.totalorder 0, 0
    // Predicated region
    $region6: #{tpu_custom_call.1} parent=1 // pred_check
      %p13 = pneg %p12
    $region7: #{tpu_custom_call.1} parent=1 // pred_check_branch
      %15 = sbr.rel (%p13) target = $region9
    $region8: #{tpu_custom_call.1} parent=1 // pred_region
      %vm16 = vcmask 65536
      %17 = vst.msk [vmem:[#allocation2] sm:$0x1] %vm16, 0.0
      %18 = vst.msk [vmem:[#allocation3] sm:$0x1] %vm16, 0.0
    $region9: #{tpu_custom_call.1} parent=1 // pred_fallthru
      _
    %v19 = vld [vmem:[%s0] sm:$0xff]
    %v20 = vld [vmem:[%s0 + $0x8] sm:$0x1]
    %v21 = vld [vmem:[%s0 + $0x10] sm:$0xff]
    %v22 = vld [vmem:[%s0 + $0x18] sm:$0x1]
    %v23 = vld [vmem:[#allocation2] sm:$0x1]
    %vm24 = vcmask 64512
    %v25 = vsel %vm24, %v19, 0.0
    %v26 = vsel %vm24, %v21, 0.0
    %v27 = vadd.f32 %v25, %v26
    %28 = vadd.xlane.f32.xlu0 %v27
    %v29 = vpop.xlane.xlu0 %28
    %vm30 = vcmask 57344
    %v31 = vsel %vm30, %v20, 0.0
    %v32 = vsel %vm30, %v22, 0.0
    %v33 = vadd.f32 %v31, %v32
    %34 = vadd.xlane.f32.xlu0 %v33
    %v35 = vpop.xlane.xlu0 %34
    %v38 = vlaneseq
    %v39 = vshrl.u32 %v38, 7
    %v40 = vsub.s32 0, %v39
    %v41 = vrot.slane %v29, %v40
    %v42 = vlaneseq
    %v43 = vshrl.u32 %v42, 7
    %v44 = vsub.s32 1, %v43
    %v45 = vrot.slane %v29, %v44
    %v46 = vlaneseq
    %v47 = vshrl.u32 %v46, 7
    %v48 = vsub.s32 2, %v47
    %v49 = vrot.slane %v29, %v48
    %v50 = vlaneseq
    %v51 = vshrl.u32 %v50, 7
    %v52 = vsub.s32 3, %v51
    %v53 = vrot.slane %v29, %v52
    %v54 = vlaneseq
    %v55 = vshrl.u32 %v54, 7
    %v56 = vsub.s32 4, %v55
    %v57 = vrot.slane %v29, %v56
    %v58 = vlaneseq
    %v59 = vshrl.u32 %v58, 7
    %v60 = vsub.s32 5, %v59
    %v61 = vrot.slane %v29, %v60
    %v62 = vlaneseq
    %v63 = vshrl.u32 %v62, 7
    %v64 = vsub.s32 6, %v63
    %v65 = vrot.slane %v29, %v64
    %v66 = vlaneseq
    %v67 = vshrl.u32 %v66, 7
    %v68 = vsub.s32 7, %v67
    %v69 = vrot.slane %v29, %v68
    %v70 = vlaneseq
    %v71 = vshrl.u32 %v70, 7
    %v72 = vsub.s32 0, %v71
    %v73 = vrot.slane %v35, %v72
    %v74 = vcombine.low %v41, %v45
    %v75 = vcombine.low %v49, %v53
    %v76 = vcombine.low %v57, %v61
    %v77 = vcombine.low %v65, %v69
    %v79 = vunpack.c.l.s4 1966171168
    %v80 = vunpack.c.0.s8 %v79
    %v81 = vlaneseq
    %v82 = vshrl.u32 %v81, 7
    %v83 = vsub.s32 %v80, %v82
    %v84 = vrot.slane %v74, %v83
    %v86 = vunpack.c.l.s4 1966171168
    %v87 = vunpack.c.0.s8 %v86
    %v88 = vlaneseq
    %v89 = vshrl.u32 %v88, 7
    %v90 = vsub.s32 %v87, %v89
    %v91 = vrot.slane %v75, %v90
    %v93 = vunpack.c.l.s4 1966171168
    %v94 = vunpack.c.0.s8 %v93
    %v95 = vlaneseq
    %v96 = vshrl.u32 %v95, 7
    %v97 = vsub.s32 %v94, %v96
    %v98 = vrot.slane %v76, %v97
    %v100 = vunpack.c.l.s4 1966171168
    %v101 = vunpack.c.0.s8 %v100
    %v102 = vlaneseq
    %v103 = vshrl.u32 %v102, 7
    %v104 = vsub.s32 %v101, %v103
    %v105 = vrot.slane %v77, %v104
    %v106 = vcombine.low %v84, %v91
    %v107 = vcombine.low %v98, %v105
    %v109 = vunpack.c.l.s4 1966171168
    %v110 = vunpack.c.0.s8 %v109
    %v111 = vlaneseq
    %v112 = vshrl.u32 %v111, 7
    %v113 = vsub.s32 %v110, %v112
    %v114 = vrot.slane %v106, %v113
    %v116 = vunpack.c.l.s4 1966171168
    %v117 = vunpack.c.0.s8 %v116
    %v118 = vlaneseq
    %v119 = vshrl.u32 %v118, 7
    %v120 = vsub.s32 %v117, %v119
    %v121 = vrot.slane %v107, %v120
    %v122 = vcombine.low %v114, %v121
    %v124 = vunpack.c.l.s4 1966171168
    %v125 = vunpack.c.0.s8 %v124
    %v126 = vlaneseq
    %v127 = vshrl.u32 %v126, 7
    %v128 = vsub.s32 %v125, %v127
    %v129 = vrot.slane %v73, %v128
    %v131 = vunpack.c.l.s4 1966171168
    %v132 = vunpack.c.0.s8 %v131
    %v133 = vlaneseq
    %v134 = vshrl.u32 %v133, 7
    %v135 = vsub.s32 %v132, %v134
    %v136 = vrot.slane %v129, %v135
    %137 = vset.pattern.permute.xlu0 0
    %138 = vperm.xlu0 %137, %v122
    %v139 = vpop.permute.xlu0 %138
    %140 = vset.pattern.permute.xlu0 0
    %141 = vperm.xlu0 %140, %v136
    %v142 = vpop.permute.xlu0 %141
    %v143 = vlaneseq
    %v144 = vand.u32 %v143, 127
    %v145 = vlaneseq
    %v146 = vshrl.u32 %v145, 7
    %v147 = vsub.s32 %v144, %v146
    %v148 = vrot.slane %v139, %v147
    %v149 = vadd.s32 %v144, 4294967288
    %v150 = vlaneseq
    %v151 = vshrl.u32 %v150, 7
    %v152 = vsub.s32 %v149, %v151
    %v153 = vrot.slane %v142, %v152
    %vm154 = vcmask 130112
    %v155 = vsel %vm154, %v153, %v148
    %v157 = vunpack.c.l.s4 1966171168
    %v158 = vunpack.c.0.s8 %v157
    %v159 = vlaneseq
    %v160 = vshrl.u32 %v159, 7
    %v161 = vsub.s32 %v158, %v160
    %v162 = vrot.slane %v155, %v161
    %v164 = vunpack.c.l.s4 1966171168
    %v165 = vunpack.c.0.s8 %v164
    %v166 = vlaneseq
    %v167 = vshrl.u32 %v166, 7
    %v168 = vsub.s32 %v165, %v167
    %v169 = vrot.slane %v162, %v168
    %v171 = vadd.f32 %v23, %v169
    %vm172 = vcmask 65536
    %173 = vst.msk [vmem:[#allocation2] sm:$0x1] %vm172, %v171
    %v174 = vld [vmem:[#allocation3] sm:$0x1]
    %v175 = vmul.f32 %v19, %v19
    %v176 = vmul.f32 %v20, %v20
    %v177 = vmul.f32 %v21, %v21
    %v178 = vmul.f32 %v22, %v22
    %v179 = vsel %vm24, %v175, 0.0
    %v180 = vsel %vm24, %v177, 0.0
    %v181 = vadd.f32 %v179, %v180
    %182 = vadd.xlane.f32.xlu0 %v181
    %v183 = vpop.xlane.xlu0 %182
    %v184 = vsel %vm30, %v176, 0.0
    %v185 = vsel %vm30, %v178, 0.0
    %v186 = vadd.f32 %v184, %v185
    %187 = vadd.xlane.f32.xlu0 %v186
    %v188 = vpop.xlane.xlu0 %187
    %v191 = vlaneseq
    %v192 = vshrl.u32 %v191, 7
    %v193 = vsub.s32 0, %v192
    %v194 = vrot.slane %v183, %v193
    %v195 = vlaneseq
    %v196 = vshrl.u32 %v195, 7
    %v197 = vsub.s32 1, %v196
    %v198 = vrot.slane %v183, %v197
    %v199 = vlaneseq
    %v200 = vshrl.u32 %v199, 7
    %v201 = vsub.s32 2, %v200
    %v202 = vrot.slane %v183, %v201
    %v203 = vlaneseq
    %v204 = vshrl.u32 %v203, 7
    %v205 = vsub.s32 3, %v204
    %v206 = vrot.slane %v183, %v205
    %v207 = vlaneseq
    %v208 = vshrl.u32 %v207, 7
    %v209 = vsub.s32 4, %v208
    %v210 = vrot.slane %v183, %v209
    %v211 = vlaneseq
    %v212 = vshrl.u32 %v211, 7
    %v213 = vsub.s32 5, %v212
    %v214 = vrot.slane %v183, %v213
    %v215 = vlaneseq
    %v216 = vshrl.u32 %v215, 7
    %v217 = vsub.s32 6, %v216
    %v218 = vrot.slane %v183, %v217
    %v219 = vlaneseq
    %v220 = vshrl.u32 %v219, 7
    %v221 = vsub.s32 7, %v220
    %v222 = vrot.slane %v183, %v221
    %v223 = vlaneseq
    %v224 = vshrl.u32 %v223, 7
    %v225 = vsub.s32 0, %v224
    %v226 = vrot.slane %v188, %v225
    %v227 = vcombine.low %v194, %v198
    %v228 = vcombine.low %v202, %v206
    %v229 = vcombine.low %v210, %v214
    %v230 = vcombine.low %v218, %v222
    %v232 = vunpack.c.l.s4 1966171168
    %v233 = vunpack.c.0.s8 %v232
    %v234 = vlaneseq
    %v235 = vshrl.u32 %v234, 7
    %v236 = vsub.s32 %v233, %v235
    %v237 = vrot.slane %v227, %v236
    %v239 = vunpack.c.l.s4 1966171168
    %v240 = vunpack.c.0.s8 %v239
    %v241 = vlaneseq
    %v242 = vshrl.u32 %v241, 7
    %v243 = vsub.s32 %v240, %v242
    %v244 = vrot.slane %v228, %v243
    %v246 = vunpack.c.l.s4 1966171168
    %v247 = vunpack.c.0.s8 %v246
    %v248 = vlaneseq
    %v249 = vshrl.u32 %v248, 7
    %v250 = vsub.s32 %v247, %v249
    %v251 = vrot.slane %v229, %v250
    %v253 = vunpack.c.l.s4 1966171168
    %v254 = vunpack.c.0.s8 %v253
    %v255 = vlaneseq
    %v256 = vshrl.u32 %v255, 7
    %v257 = vsub.s32 %v254, %v256
    %v258 = vrot.slane %v230, %v257
    %v259 = vcombine.low %v237, %v244
    %v260 = vcombine.low %v251, %v258
    %v262 = vunpack.c.l.s4 1966171168
    %v263 = vunpack.c.0.s8 %v262
    %v264 = vlaneseq
    %v265 = vshrl.u32 %v264, 7
    %v266 = vsub.s32 %v263, %v265
    %v267 = vrot.slane %v259, %v266
    %v269 = vunpack.c.l.s4 1966171168
    %v270 = vunpack.c.0.s8 %v269
    %v271 = vlaneseq
    %v272 = vshrl.u32 %v271, 7
    %v273 = vsub.s32 %v270, %v272
    %v274 = vrot.slane %v260, %v273
    %v275 = vcombine.low %v267, %v274
    %v277 = vunpack.c.l.s4 1966171168
    %v278 = vunpack.c.0.s8 %v277
    %v279 = vlaneseq
    %v280 = vshrl.u32 %v279, 7
    %v281 = vsub.s32 %v278, %v280
    %v282 = vrot.slane %v226, %v281
    %v284 = vunpack.c.l.s4 1966171168
    %v285 = vunpack.c.0.s8 %v284
    %v286 = vlaneseq
    %v287 = vshrl.u32 %v286, 7
    %v288 = vsub.s32 %v285, %v287
    %v289 = vrot.slane %v282, %v288
    %290 = vset.pattern.permute.xlu0 0
    %291 = vperm.xlu0 %290, %v275
    %v292 = vpop.permute.xlu0 %291
    %293 = vset.pattern.permute.xlu0 0
    %294 = vperm.xlu0 %293, %v289
    %v295 = vpop.permute.xlu0 %294
    %v296 = vlaneseq
    %v297 = vshrl.u32 %v296, 7
    %v298 = vsub.s32 %v144, %v297
    %v299 = vrot.slane %v292, %v298
    %v300 = vlaneseq
    %v301 = vshrl.u32 %v300, 7
    %v302 = vsub.s32 %v149, %v301
    %v303 = vrot.slane %v295, %v302
    %v304 = vsel %vm154, %v303, %v299
    %v306 = vunpack.c.l.s4 1966171168
    %v307 = vunpack.c.0.s8 %v306
    %v308 = vlaneseq
    %v309 = vshrl.u32 %v308, 7
    %v310 = vsub.s32 %v307, %v309
    %v311 = vrot.slane %v304, %v310
    %v313 = vunpack.c.l.s4 1966171168
    %v314 = vunpack.c.0.s8 %v313
    %v315 = vlaneseq
    %v316 = vshrl.u32 %v315, 7
    %v317 = vsub.s32 %v314, %v316
    %v318 = vrot.slane %v311, %v317
    %v320 = vadd.f32 %v174, %v318
    %321 = vst.msk [vmem:[#allocation3] sm:$0x1] %vm172, %v320
    // Predicated region
    $region10: #{tpu_custom_call.1} parent=1 // pred_check
      %p322 = pneg %p12
    $region11: #{tpu_custom_call.1} parent=1 // pred_check_branch
      %324 = sbr.rel (%p322) target = $region13
    $region12: #{tpu_custom_call.1} parent=1 // pred_region
      %v325 = vld [vmem:[#allocation2] sm:$0x1]
      %v326 = vrcp.pop 16.0
      %v327 = vmul.f32 %v325, %v326
      %v328 = vld [vmem:[#allocation3] sm:$0x1]
      %v329 = vmul.f32 %v327, 16.0
      %v330 = vmul.f32 %v329, %v327
      %v331 = vsub.f32 %v328, %v330
      %v332 = vrcp.pop 15.0
      %v333 = vmul.f32 %v331, %v332
      %v334 = vmax.f32 %v333, 0.0
      %v335 = vrsqrt.pop %v334
      %v336 = vmul.f32 %v334, %v335
      %vm337 = vcmp.eq.f32.partialorder %v334, inf
      %v338 = vsel %vm337, %v334, %v336
      %vm339 = vcmp.eq.f32.partialorder %v334, 0.0
      %v340 = vand.u32 %v334, 2147483648
      %v341 = vsel %vm339, %v340, %v338
      %v342 = vsub.f32 0.0, %v327
      %343 = vst.msk [vmem:[#allocation4] sm:$0x1] %vm172, %v342
      %v344 = vadd.f32 %v341, 1e-06
      %v345 = vrcp.pop %v344
      %v346 = vmul.f32 1.0, %v345
      %347 = vst.msk [vmem:[#allocation6] sm:$0x1] %vm172, %v346
    $region13: #{tpu_custom_call.1} parent=1 // pred_fallthru
      _
    // Predicated region
    $region14: #{tpu_custom_call.1} parent=1 // pred_check
      _
    $region15: #{tpu_custom_call.1} parent=1 // pred_check_branch
      %349 = sbr.rel (0) target = $region17
    $region16: #{tpu_custom_call.1} parent=1 // pred_region
      %s351 = ssub.s32 16, 16
      %352 = vsyncadd [#allocation5], %s351
      %s354 = sshll.u32 [#allocation4], 4
      %s355 = int_to_ptr.vmem [resolvable:$true] %s354
      %357 = dma.vmem_to_hbm [thread:$0]  %s355, 16, %s1, [#allocation5]
    $region17: #{tpu_custom_call.1} parent=1 // pred_fallthru
      _
    // Predicated region
    $region18: #{tpu_custom_call.1} parent=1 // pred_check
      _
    $region19: #{tpu_custom_call.1} parent=1 // pred_check_branch
      %359 = sbr.rel (0) target = $region21
    $region20: #{tpu_custom_call.1} parent=1 // pred_region
      %s361 = ssub.s32 16, 16
      %362 = vsyncadd [#allocation7], %s361
      %s364 = sshll.u32 [#allocation6], 4
      %s365 = int_to_ptr.vmem [resolvable:$true] %s364
      %367 = dma.vmem_to_hbm [thread:$0]  %s365, 16, %s2, [#allocation7]
    $region21: #{tpu_custom_call.1} parent=1 // pred_fallthru
      _
    // Predicated region
    $region22: #{tpu_custom_call.1} parent=1 // pred_check
      _
    $region23: #{tpu_custom_call.1} parent=1 // pred_check_branch
      %369 = sbr.rel (0) target = $region25
    $region24: #{tpu_custom_call.1} parent=1 // pred_region
      %370 = dma.done [#allocation5], 16
    $region25: #{tpu_custom_call.1} parent=1 // pred_fallthru
      _
    // Predicated region
    $region26: #{tpu_custom_call.1} parent=1 // pred_check
      _
    $region27: #{tpu_custom_call.1} parent=1 // pred_check_branch
      %372 = sbr.rel (0) target = $region29
    $region28: #{tpu_custom_call.1} parent=1 // pred_region
      %373 = dma.done [#allocation7], 16
    $region29: #{tpu_custom_call.1} parent=1 // pred_fallthru
      _
    %374 = vsyncpa [#allocation5], 1
    %375 = vsyncpa [#allocation7], 1

</llo_original>
